<compile_context>
chip_gen: v7x
topology: tpu7x:2x2x1
jax: 0.10.0
libtpu: 0.0.40
codegen_flags: <defaults>
</compile_context>

<pallas_src>
import functools

import jax
import jax.numpy as jnp
from jax.experimental import pallas as pl
from jax.experimental.pallas import tpu as pltpu


def _round_up(x: int, m: int) -> int:
    return (x + m - 1) // m * m


def _cdiv(a: int, b: int) -> int:
    return (a + b - 1) // b


def mlp_kernel(x_ref, w1_ref, b1_ref, w2_ref, b2_ref, w3_ref, b3_ref, o_ref):
    # Zero-padded feature columns in the (padded) weights propagate zeros, so the
    # valid region of the output is unchanged. bf16 operands feed the MXU
    # natively; bias add + ReLU stay in f32.
    x = x_ref[...].astype(jnp.bfloat16)
    h1 = jnp.dot(x, w1_ref[...], preferred_element_type=jnp.float32) + b1_ref[...]
    h1 = jnp.maximum(h1, 0.0).astype(jnp.bfloat16)
    h2 = jnp.dot(h1, w2_ref[...], preferred_element_type=jnp.float32) + b2_ref[...]
    h2 = jnp.maximum(h2, 0.0).astype(jnp.bfloat16)
    out = jnp.dot(h2, w3_ref[...], preferred_element_type=jnp.float32) + b3_ref[...]
    o_ref[...] = out.astype(o_ref.dtype)


@functools.partial(jax.jit, static_argnames=("min_pallas_batch",))
def neural_net_forward(x, params, *, min_pallas_batch=64):
    """x: (B, input_size) float32. params: dict of f32 weights/biases."""
    w1, b1, w2, b2, w3, b3 = (
        params["w1"], params["b1"],
        params["w2"], params["b2"],
        params["w3"], params["b3"],
    )
    B, D_in = x.shape
    H = w1.shape[1]
    C = w3.shape[1]

    # ---- small-batch fast path: one (8,128) tile of work; XLA's fused dots beat
    # custom-call dispatch + pipeline setup.
    if B < min_pallas_batch:
        h1 = jnp.maximum(x @ w1 + b1, 0.0)
        h2 = jnp.maximum(h1 @ w2 + b2, 0.0)
        return h2 @ w3 + b3

    # ---- feature padding for hidden / output dims only (lane-dense 128 multiples).
    # x's feature dim stays at the true D_in (block dim == full array dim).
    # TODO(synk): at large hidden sizes on v6e, pad H/C to multiples of 256 to
    # fully feed the 2x256x256 MXU.
    H_p = _round_up(H, 128)
    C_p = _round_up(C, 128)

    # ---- grid: fewest steps that keep a step <= MAX_TM rows; even step count when
    # multi-step so v7x's two TensorCores get a balanced split; batch padding is
    # at most (8*steps - 1) rows.
    MAX_TM = 1024
    steps = max(1, _cdiv(B, MAX_TM))
    if steps > 1 and steps % 2 == 1:
        steps += 1
    TM = _round_up(_cdiv(B, steps), 8)
    B_p = TM * steps

    x_p = x if B_p == B else jnp.pad(x, ((0, B_p - B), (0, 0)))

    pad2 = lambda a, r, c: jnp.pad(a, ((0, r - a.shape[0]), (0, c - a.shape[1])))
    # Weights in bf16 (MXU-native, half the DMA/VMEM); biases stay f32.
    w1_p = pad2(w1, D_in, H_p).astype(jnp.bfloat16)
    w2_p = pad2(w2, H_p, H_p).astype(jnp.bfloat16)
    w3_p = pad2(w3, H_p, C_p).astype(jnp.bfloat16)
    b1_p = pad2(b1, 1, H_p)
    b2_p = pad2(b2, 1, H_p)
    b3_p = pad2(b3, 1, C_p)

    # Weights/biases: constant index_map -> VMEM-resident across the grid; a
    # single buffer is enough since the block never changes.
    resident = lambda shape: pl.BlockSpec(
        shape, lambda i: (0, 0), pipeline_mode=pl.Buffered(1)
    )

    # ---- VMEM budget: double-buffered x/out tiles + single-buffered params +
    # intermediates, capped at ~75% of the chip's VMEM (v7x: 64 MiB physical).
    f32, bf16 = 4, 2
    param_bytes = (D_in * H_p + H_p * H_p + H_p * C_p) * bf16 + (2 * H_p + C_p) * f32
    needed = (
        2 * TM * D_in * f32          # x tile (double-buffered)
        + 2 * TM * C_p * f32         # out tile (double-buffered)
        + param_bytes                # resident params (single-buffered)
        + 4 * TM * H_p * f32         # h1/h2 intermediates + bf16 copies + slack
        + (2 << 20)                  # headroom
    )
    try:
        vmem_cap = int(getattr(pltpu.get_tpu_info(), "vmem_capacity_bytes", 64 << 20))
    except Exception:
        vmem_cap = 64 << 20          # conservative: v7x per-TC VMEM
    vmem_bytes = min(int(needed), vmem_cap * 3 // 4)

    # Advisory cost hint using the shapes actually DMA'd / computed (padded).
    cost = pl.CostEstimate(
        flops=2 * B_p * (D_in * H_p + H_p * H_p + H_p * C_p),
        transcendentals=0,
        bytes_accessed=(
            B_p * D_in * f32 + B_p * C_p * f32
            + (D_in * H_p + H_p * H_p + H_p * C_p) * bf16
            + (2 * H_p + C_p) * f32
        ),
    )

    out_p = pl.pallas_call(
        mlp_kernel,
        out_shape=jax.ShapeDtypeStruct((B_p, C_p), jnp.float32),
        grid=(steps,),
        in_specs=[
            pl.BlockSpec((TM, D_in), lambda i: (i, 0)),
            resident((D_in, H_p)), resident((1, H_p)),
            resident((H_p, H_p)), resident((1, H_p)),
            resident((H_p, C_p)), resident((1, C_p)),
        ],
        out_specs=pl.BlockSpec((TM, C_p), lambda i: (i, 0)),
        compiler_params=pltpu.CompilerParams(
            dimension_semantics=("parallel",),
            vmem_limit_bytes=int(vmem_bytes),
        ),
        cost_estimate=cost,
    )(x_p, w1_p, b1_p, w2_p, b2_p, w3_p, b3_p)

    out = out_p[:, :C] if C_p != C else out_p
    return out[:B] if B_p != B else out


def init_params(key, input_size, hidden_size, num_classes):
    # Deterministic init mimicking nn.Linear's uniform(-1/sqrt(fan_in), 1/sqrt(fan_in)).
    keys = jax.random.split(key, 6)

    def lin(kw, kb, fan_in, fan_out):
        bound = 1.0 / jnp.sqrt(fan_in)
        w = jax.random.uniform(kw, (fan_in, fan_out), jnp.float32, -bound, bound)
        b = jax.random.uniform(kb, (1, fan_out), jnp.float32, -bound, bound)
        return w, b

    w1, b1 = lin(keys[0], keys[1], input_size, hidden_size)
    w2, b2 = lin(keys[2], keys[3], hidden_size, hidden_size)
    w3, b3 = lin(keys[4], keys[5], hidden_size, num_classes)
    return {"w1": w1, "b1": b1, "w2": w2, "b2": b2, "w3": w3, "b3": b3}


def _reference(x, p, *, bf16):
    cast = (lambda a: a.astype(jnp.bfloat16)) if bf16 else (lambda a: a)
    h1 = jnp.maximum(
        jnp.dot(cast(x), cast(p["w1"]), preferred_element_type=jnp.float32) + p["b1"], 0.0)
    h2 = jnp.maximum(
        jnp.dot(cast(h1), cast(p["w2"]), preferred_element_type=jnp.float32) + p["b2"], 0.0)
    return jnp.dot(cast(h2), cast(p["w3"]), preferred_element_type=jnp.float32) + p["b3"]


if __name__ == "__main__":
    input_size, hidden_size, num_classes = 32, 64, 16
    batch = 8

    key = jax.random.PRNGKey(0)
    k_x, k_p = jax.random.split(key)
    x = jax.random.normal(k_x, (batch, input_size), jnp.float32)
    params = init_params(k_p, input_size, hidden_size, num_classes)

    # Force the Pallas path for the tiny batch so the kernel itself is exercised.
    out = jax.block_until_ready(neural_net_forward(x, params, min_pallas_batch=0))
    assert out.shape == (batch, num_classes)
    assert jnp.allclose(out, _reference(x, params, bf16=True), atol=5e-3, rtol=5e-3)
    assert jnp.allclose(out, _reference(x, params, bf16=False), atol=5e-2, rtol=5e-2)

    # Multi-step grid path: B=1040 -> TM=520, grid=(2,), zero batch-padding rows.
    big_batch = 1040
    xb = jax.random.normal(jax.random.PRNGKey(1), (big_batch, input_size), jnp.float32)
    outb = jax.block_until_ready(neural_net_forward(xb, params))
    assert outb.shape == (big_batch, num_classes)
    assert jnp.allclose(outb, _reference(xb, params, bf16=True), atol=5e-3, rtol=5e-3)
    assert jnp.allclose(outb, _reference(xb, params, bf16=False), atol=5e-2, rtol=5e-2)

    # Small-batch fast path (plain XLA, exact f32).
    outs = jax.block_until_ready(neural_net_forward(x, params))
    assert jnp.allclose(outs, _reference(x, params, bf16=False), atol=1e-5, rtol=1e-5)

    print("KERNEL_OK")
</pallas_src>

<mosaic_0001>
module attributes {stable_mosaic.version = 11 : i64} {
  func.func @mlp_kernel(%arg0: i32, %arg1: memref<8x32xf32, #tpu.memory_space<vmem>>, %arg2: memref<32x128xbf16, #tpu.memory_space<vmem>>, %arg3: memref<1x128xf32, #tpu.memory_space<vmem>>, %arg4: memref<128x128xbf16, #tpu.memory_space<vmem>>, %arg5: memref<1x128xf32, #tpu.memory_space<vmem>>, %arg6: memref<128x128xbf16, #tpu.memory_space<vmem>>, %arg7: memref<1x128xf32, #tpu.memory_space<vmem>>, %arg8: memref<8x128xf32, #tpu.memory_space<vmem>>) attributes {dimension_semantics = [#tpu.dimension_semantics<parallel>], iteration_bounds = array<i64: 1>, scalar_prefetch = 0 : i64, scratch_operands = 0 : i64, tpu.core_type = #tpu.core_type<tc>, window_params = [{transform_indices = @transform_0, window_bounds = array<i64: 8, 32>}, {pipeline_mode = #tpu.pipeline_mode<synchronous>, transform_indices = @transform_1, window_bounds = array<i64: 32, 128>}, {pipeline_mode = #tpu.pipeline_mode<synchronous>, transform_indices = @transform_2, window_bounds = array<i64: 1, 128>}, {pipeline_mode = #tpu.pipeline_mode<synchronous>, transform_indices = @transform_3, window_bounds = array<i64: 128, 128>}, {pipeline_mode = #tpu.pipeline_mode<synchronous>, transform_indices = @transform_4, window_bounds = array<i64: 1, 128>}, {pipeline_mode = #tpu.pipeline_mode<synchronous>, transform_indices = @transform_5, window_bounds = array<i64: 128, 128>}, {pipeline_mode = #tpu.pipeline_mode<synchronous>, transform_indices = @transform_6, window_bounds = array<i64: 1, 128>}, {transform_indices = @transform_7, window_bounds = array<i64: 8, 128>}]} {
    %c0 = arith.constant 0 : index
    %c0_0 = arith.constant 0 : index
    %0 = vector.load %arg1[%c0, %c0_0] : memref<8x32xf32, #tpu.memory_space<vmem>>, vector<8x32xf32>
    %1 = arith.truncf %0 : vector<8x32xf32> to vector<8x32xbf16>
    %c0_1 = arith.constant 0 : index
    %c0_2 = arith.constant 0 : index
    %2 = vector.load %arg2[%c0_1, %c0_2] : memref<32x128xbf16, #tpu.memory_space<vmem>>, vector<32x128xbf16>
    %cst = arith.constant dense<0.000000e+00> : vector<8x128xf32>
    %3 = tpu.matmul %1, %2, %cst {dimension_numbers = #tpu.dot_dimension_numbers<[1], [0], [0], [1], [0, 0, 1, 1], [], []>} : vector<8x32xbf16>, vector<32x128xbf16>, vector<8x128xf32> -> vector<8x128xf32>
    %c0_3 = arith.constant 0 : index
    %c0_4 = arith.constant 0 : index
    %4 = vector.load %arg3[%c0_3, %c0_4] : memref<1x128xf32, #tpu.memory_space<vmem>>, vector<1x128xf32>
    %5 = vector.broadcast %4 : vector<1x128xf32> to vector<8x128xf32>
    %6 = arith.addf %3, %5 : vector<8x128xf32>
    %cst_5 = arith.constant 0.000000e+00 : f32
    %7 = vector.broadcast %cst_5 : f32 to vector<8x128xf32>
    %8 = arith.maximumf %6, %7 : vector<8x128xf32>
    %9 = arith.truncf %8 : vector<8x128xf32> to vector<8x128xbf16>
    %c0_6 = arith.constant 0 : index
    %c0_7 = arith.constant 0 : index
    %10 = vector.load %arg4[%c0_6, %c0_7] : memref<128x128xbf16, #tpu.memory_space<vmem>>, vector<128x128xbf16>
    %cst_8 = arith.constant dense<0.000000e+00> : vector<8x128xf32>
    %11 = tpu.matmul %9, %10, %cst_8 {dimension_numbers = #tpu.dot_dimension_numbers<[1], [0], [0], [1], [0, 0, 1, 1], [], []>} : vector<8x128xbf16>, vector<128x128xbf16>, vector<8x128xf32> -> vector<8x128xf32>
    %c0_9 = arith.constant 0 : index
    %c0_10 = arith.constant 0 : index
    %12 = vector.load %arg5[%c0_9, %c0_10] : memref<1x128xf32, #tpu.memory_space<vmem>>, vector<1x128xf32>
    %13 = vector.broadcast %12 : vector<1x128xf32> to vector<8x128xf32>
    %14 = arith.addf %11, %13 : vector<8x128xf32>
    %cst_11 = arith.constant 0.000000e+00 : f32
    %15 = vector.broadcast %cst_11 : f32 to vector<8x128xf32>
    %16 = arith.maximumf %14, %15 : vector<8x128xf32>
    %17 = arith.truncf %16 : vector<8x128xf32> to vector<8x128xbf16>
    %c0_12 = arith.constant 0 : index
    %c0_13 = arith.constant 0 : index
    %18 = vector.load %arg6[%c0_12, %c0_13] : memref<128x128xbf16, #tpu.memory_space<vmem>>, vector<128x128xbf16>
    %cst_14 = arith.constant dense<0.000000e+00> : vector<8x128xf32>
    %19 = tpu.matmul %17, %18, %cst_14 {dimension_numbers = #tpu.dot_dimension_numbers<[1], [0], [0], [1], [0, 0, 1, 1], [], []>} : vector<8x128xbf16>, vector<128x128xbf16>, vector<8x128xf32> -> vector<8x128xf32>
    %c0_15 = arith.constant 0 : index
    %c0_16 = arith.constant 0 : index
    %20 = vector.load %arg7[%c0_15, %c0_16] : memref<1x128xf32, #tpu.memory_space<vmem>>, vector<1x128xf32>
    %21 = vector.broadcast %20 : vector<1x128xf32> to vector<8x128xf32>
    %22 = arith.addf %19, %21 : vector<8x128xf32>
    %c0_17 = arith.constant 0 : index
    %c0_18 = arith.constant 0 : index
    %23 = vector.load %arg8[%c0_17, %c0_18] : memref<8x128xf32, #tpu.memory_space<vmem>>, vector<8x128xf32>
    tpu.vector_store %arg8[%c0_17, %c0_18], %22 {strides = array<i32>} : memref<8x128xf32, #tpu.memory_space<vmem>>, vector<8x128xf32>,
    return
  }
  func.func @transform_0(%arg0: i32) -> (i32, i32) {
    %c0_i32 = arith.constant 0 : i32
    %c0_i32_0 = arith.constant 0 : i32
    return %arg0, %c0_i32 : i32, i32
  }
  func.func @transform_1(%arg0: i32) -> (i32, i32) {
    %c0_i32 = arith.constant 0 : i32
    %c0_i32_0 = arith.constant 0 : i32
    %c0_i32_1 = arith.constant 0 : i32
    return %c0_i32, %c0_i32_0 : i32, i32
  }
  func.func @transform_2(%arg0: i32) -> (i32, i32) {
    %c0_i32 = arith.constant 0 : i32
    %c0_i32_0 = arith.constant 0 : i32
    %c0_i32_1 = arith.constant 0 : i32
    return %c0_i32, %c0_i32_0 : i32, i32
  }
  func.func @transform_3(%arg0: i32) -> (i32, i32) {
    %c0_i32 = arith.constant 0 : i32
    %c0_i32_0 = arith.constant 0 : i32
    %c0_i32_1 = arith.constant 0 : i32
    return %c0_i32, %c0_i32_0 : i32, i32
  }
  func.func @transform_4(%arg0: i32) -> (i32, i32) {
    %c0_i32 = arith.constant 0 : i32
    %c0_i32_0 = arith.constant 0 : i32
    %c0_i32_1 = arith.constant 0 : i32
    return %c0_i32, %c0_i32_0 : i32, i32
  }
  func.func @transform_5(%arg0: i32) -> (i32, i32) {
    %c0_i32 = arith.constant 0 : i32
    %c0_i32_0 = arith.constant 0 : i32
    %c0_i32_1 = arith.constant 0 : i32
    return %c0_i32, %c0_i32_0 : i32, i32
  }
  func.func @transform_6(%arg0: i32) -> (i32, i32) {
    %c0_i32 = arith.constant 0 : i32
    %c0_i32_0 = arith.constant 0 : i32
    %c0_i32_1 = arith.constant 0 : i32
    return %c0_i32, %c0_i32_0 : i32, i32
  }
  func.func @transform_7(%arg0: i32) -> (i32, i32) {
    %c0_i32 = arith.constant 0 : i32
    %c0_i32_0 = arith.constant 0 : i32
    return %arg0, %c0_i32 : i32, i32
  }
}

</mosaic_0001>

<llo_original>
// kernel: neural_net_forward.1
$region0: #{neural_net_forward.1}
  #allocation0 [shape = 'u32[]', space=smem, size = 0x4, offset = 0x4, fixed_abs, tag = 'smem constant byte address 0x4 - core index']
  #allocation1 [shape = 'u32[144,128]{1,0:T(1,128)}', space=vmem, size = 0x12000, scoped, tag = 'internal scratch']
  %s0 = inlined_call_operand.vmem [shape: f32[8,32], index: 0, kind: input, shape index: {}]
  %s1 = inlined_call_operand.vmem [shape: bf16[32,128], index: 1, kind: input, shape index: {}]
  %s2 = inlined_call_operand.vmem [shape: f32[1,128], index: 2, kind: input, shape index: {}]
  %s3 = inlined_call_operand.vmem [shape: bf16[128,128], index: 3, kind: input, shape index: {}]
  %s4 = inlined_call_operand.vmem [shape: f32[1,128], index: 4, kind: input, shape index: {}]
  %s5 = inlined_call_operand.vmem [shape: bf16[128,128], index: 5, kind: input, shape index: {}]
  %s6 = inlined_call_operand.vmem [shape: f32[1,128], index: 6, kind: input, shape index: {}]
  %s7 = inlined_call_operand.hbm [shape: f32[8,128], index: 7, kind: output, shape index: {}]
  %s8 = sld [smem:[#allocation0]]
  $region38: #{neural_net_forward.1} parent=0
    _
  %s10 = ssub.s32 1, %s8
  %s11 = scalar_select 0, %s10, %s8
  $region1: #{neural_net_forward.1} parent=0
    #allocation2 [shape = 'u8[4096]{0}', space=vmem, size = 0x1000, scoped, tag = 'output window, operand 0, single buffered']
    #allocation3 [shape = 's32[1]{0}', space=sflag, size = 0x4, scoped, tag = 'scoped memory for neural_net_forward.1']
    %12 = vsyncpa [#allocation3], 0
    // Predicated region
    $region2: #{neural_net_forward.1} parent=1 // pred_check
      _
    $region3: #{neural_net_forward.1} parent=1 // pred_check_branch
      %14 = sbr.rel (0) target = $region5
    $region4: #{neural_net_forward.1} parent=1 // pred_region
      _
    $region5: #{neural_net_forward.1} parent=1 // pred_fallthru
      _
    // Predicated region
    $region6: #{neural_net_forward.1} parent=1 // pred_check
      _
    $region7: #{neural_net_forward.1} parent=1 // pred_check_branch
      %16 = sbr.rel (0) target = $region9
    $region8: #{neural_net_forward.1} parent=1 // pred_region
      _
    $region9: #{neural_net_forward.1} parent=1 // pred_fallthru
      _
    // Predicated region
    $region10: #{neural_net_forward.1} parent=1 // pred_check
      _
    $region11: #{neural_net_forward.1} parent=1 // pred_check_branch
      %18 = sbr.rel (0) target = $region13
    $region12: #{neural_net_forward.1} parent=1 // pred_region
      _
    $region13: #{neural_net_forward.1} parent=1 // pred_fallthru
      _
    // Predicated region
    $region14: #{neural_net_forward.1} parent=1 // pred_check
      _
    $region15: #{neural_net_forward.1} parent=1 // pred_check_branch
      %20 = sbr.rel (0) target = $region17
    $region16: #{neural_net_forward.1} parent=1 // pred_region
      _
    $region17: #{neural_net_forward.1} parent=1 // pred_fallthru
      _
    // Predicated region
    $region18: #{neural_net_forward.1} parent=1 // pred_check
      _
    $region19: #{neural_net_forward.1} parent=1 // pred_check_branch
      %22 = sbr.rel (0) target = $region21
    $region20: #{neural_net_forward.1} parent=1 // pred_region
      _
    $region21: #{neural_net_forward.1} parent=1 // pred_fallthru
      _
    // Predicated region
    $region22: #{neural_net_forward.1} parent=1 // pred_check
      _
    $region23: #{neural_net_forward.1} parent=1 // pred_check_branch
      %24 = sbr.rel (0) target = $region25
    $region24: #{neural_net_forward.1} parent=1 // pred_region
      _
    $region25: #{neural_net_forward.1} parent=1 // pred_fallthru
      _
    // Predicated region
    $region26: #{neural_net_forward.1} parent=1 // pred_check
      _
    $region27: #{neural_net_forward.1} parent=1 // pred_check_branch
      %26 = sbr.rel (0) target = $region29
    $region28: #{neural_net_forward.1} parent=1 // pred_region
      _
    $region29: #{neural_net_forward.1} parent=1 // pred_fallthru
      _
    %v28 = vld [vmem:[%s0] sm:$0xff]
    %v29 = vpack.c.bf16 %v28, %v28
    %v30 = vld [vmem:[%s1] sm:$0xf]
    %v31 = vld [vmem:[%s1 + $0x4] sm:$0xf]
    %v32 = vld [vmem:[%s1 + $0x8] sm:$0xf]
    %v33 = vld [vmem:[%s1 + $0xc] sm:$0xf]
    %v34 = vld [vmem:[%s2] sm:$0x1]
    %v36 = vlaneseq
    %v37 = vshrl.u32 %v36, 7
    %v38 = vsub.s32 0, %v37
    %v39 = vrot.slane %v34, %v38
    %v45 = vunpack.c.l.b16 %v30
    %v46 = vunpack.c.l.b16 %v31
    %v47 = vunpack.c.l.b16 %v32
    %v48 = vunpack.c.l.b16 %v33
    %v49 = vpack.c.b16 %v46, %v45
    %v50 = vpack.c.b16 %v48, %v47
    %vm53 = vcmask 261120
    %v55 = vsel %vm53, %v29, 0
    %57 = vmatprep.subr.bf16.mxu0 0
    %58 = vmatpush1.bf16.msra.mxu0 %v49
    %59 = vmatprep.subr.bf16.mxu0 0
    %60 = vmatpush1.bf16.msra.mxu0 %v50
    %61 = vmatprep.subr.bf16.mxu0 0
    %62 = vmatpush1.bf16.msra.mxu0 0
    %63 = vmatprep.subr.bf16.mxu0 0
    %64 = vmatpush1.bf16.msra.mxu0 0
    %65 = vmatprep.subr.bf16.mxu0 0
    %66 = vmatpush1.bf16.msra.mxu0 0
    %67 = vmatprep.subr.bf16.mxu0 0
    %68 = vmatpush1.bf16.msra.mxu0 0
    %69 = vmatprep.subr.bf16.mxu0 0
    %70 = vmatpush1.bf16.msra.mxu0 0
    %71 = vmatprep.subr.bf16.mxu0 0
    %72 = vmatpush1.bf16.msra.mxu0 0
    %73 = vmatprep.subr.bf16.mxu0 0
    %74 = vmatpush1.bf16.msra.mxu0 0
    %75 = vmatprep.subr.bf16.mxu0 0
    %76 = vmatpush1.bf16.msra.mxu0 0
    %77 = vmatprep.subr.bf16.mxu0 0
    %78 = vmatpush1.bf16.msra.mxu0 0
    %79 = vmatprep.subr.bf16.mxu0 0
    %80 = vmatpush1.bf16.msra.mxu0 0
    %81 = vmatprep.subr.bf16.mxu0 0
    %82 = vmatpush1.bf16.msra.mxu0 0
    %83 = vmatprep.subr.bf16.mxu0 0
    %84 = vmatpush1.bf16.msra.mxu0 0
    %85 = vmatprep.subr.bf16.mxu0 0
    %86 = vmatpush1.bf16.msra.mxu0 0
    %87 = vmatprep.subr.bf16.mxu0 0
    %88 = vmatpush1.bf16.msra.mxu0 0
    %89 = vmatprep.mubr.bf16.mxu0 0
    %90 = vmatmul.mubr.bf16.gmra.mrb[0].mxu0 %v55
    %v91 = vpop.f32.mrb[0].mxu0
    %v92 = vadd.f32 %v39, %v91
    %v93 = vpop.f32.mrb[0].mxu0
    %v94 = vpop.f32.mrb[0].mxu0
    %v95 = vpop.f32.mrb[0].mxu0
    %96 = vdwg.mxu0
    %v97 = vmax.f32 %v92, 0.0
    %v98 = vpack.c.bf16 %v97, %v97
    %v99 = vld [vmem:[%s3] sm:$0xf]
    %v100 = vld [vmem:[%s3 + $0x4] sm:$0xf]
    %v101 = vld [vmem:[%s3 + $0x8] sm:$0xf]
    %v102 = vld [vmem:[%s3 + $0xc] sm:$0xf]
    %v103 = vld [vmem:[%s3 + $0x10] sm:$0xf]
    %v104 = vld [vmem:[%s3 + $0x14] sm:$0xf]
    %v105 = vld [vmem:[%s3 + $0x18] sm:$0xf]
    %v106 = vld [vmem:[%s3 + $0x1c] sm:$0xf]
    %v107 = vld [vmem:[%s3 + $0x20] sm:$0xf]
    %v108 = vld [vmem:[%s3 + $0x24] sm:$0xf]
    %v109 = vld [vmem:[%s3 + $0x28] sm:$0xf]
    %v110 = vld [vmem:[%s3 + $0x2c] sm:$0xf]
    %v111 = vld [vmem:[%s3 + $0x30] sm:$0xf]
    %v112 = vld [vmem:[%s3 + $0x34] sm:$0xf]
    %v113 = vld [vmem:[%s3 + $0x38] sm:$0xf]
    %v114 = vld [vmem:[%s3 + $0x3c] sm:$0xf]
    %v115 = vld [vmem:[%s4] sm:$0x1]
    %v117 = vlaneseq
    %v118 = vshrl.u32 %v117, 7
    %v119 = vsub.s32 0, %v118
    %v120 = vrot.slane %v115, %v119
    %v138 = vunpack.c.l.b16 %v99
    %v139 = vunpack.c.l.b16 %v100
    %v140 = vunpack.c.l.b16 %v101
    %v141 = vunpack.c.l.b16 %v102
    %v142 = vunpack.c.l.b16 %v103
    %v143 = vunpack.c.l.b16 %v104
    %v144 = vunpack.c.l.b16 %v105
    %v145 = vunpack.c.l.b16 %v106
    %v146 = vunpack.c.l.b16 %v107
    %v147 = vunpack.c.l.b16 %v108
    %v148 = vunpack.c.l.b16 %v109
    %v149 = vunpack.c.l.b16 %v110
    %v150 = vunpack.c.l.b16 %v111
    %v151 = vunpack.c.l.b16 %v112
    %v152 = vunpack.c.l.b16 %v113
    %v153 = vunpack.c.l.b16 %v114
    %v154 = vpack.c.b16 %v139, %v138
    %v155 = vpack.c.b16 %v141, %v140
    %v156 = vpack.c.b16 %v143, %v142
    %v157 = vpack.c.b16 %v145, %v144
    %v158 = vpack.c.b16 %v147, %v146
    %v159 = vpack.c.b16 %v149, %v148
    %v160 = vpack.c.b16 %v151, %v150
    %v161 = vpack.c.b16 %v153, %v152
    %170 = vmatprep.subr.bf16.mxu0 0
    %171 = vmatpush1.bf16.msra.mxu0 %v154
    %172 = vmatprep.subr.bf16.mxu0 0
    %173 = vmatpush1.bf16.msra.mxu0 %v155
    %174 = vmatprep.subr.bf16.mxu0 0
    %175 = vmatpush1.bf16.msra.mxu0 %v156
    %176 = vmatprep.subr.bf16.mxu0 0
    %177 = vmatpush1.bf16.msra.mxu0 %v157
    %178 = vmatprep.subr.bf16.mxu0 0
    %179 = vmatpush1.bf16.msra.mxu0 %v158
    %180 = vmatprep.subr.bf16.mxu0 0
    %181 = vmatpush1.bf16.msra.mxu0 %v159
    %182 = vmatprep.subr.bf16.mxu0 0
    %183 = vmatpush1.bf16.msra.mxu0 %v160
    %184 = vmatprep.subr.bf16.mxu0 0
    %185 = vmatpush1.bf16.msra.mxu0 %v161
    %186 = vmatprep.subr.bf16.mxu0 0
    %187 = vmatpush1.bf16.msra.mxu0 0
    %188 = vmatprep.subr.bf16.mxu0 0
    %189 = vmatpush1.bf16.msra.mxu0 0
    %190 = vmatprep.subr.bf16.mxu0 0
    %191 = vmatpush1.bf16.msra.mxu0 0
    %192 = vmatprep.subr.bf16.mxu0 0
    %193 = vmatpush1.bf16.msra.mxu0 0
    %194 = vmatprep.subr.bf16.mxu0 0
    %195 = vmatpush1.bf16.msra.mxu0 0
    %196 = vmatprep.subr.bf16.mxu0 0
    %197 = vmatpush1.bf16.msra.mxu0 0
    %198 = vmatprep.subr.bf16.mxu0 0
    %199 = vmatpush1.bf16.msra.mxu0 0
    %200 = vmatprep.subr.bf16.mxu0 0
    %201 = vmatpush1.bf16.msra.mxu0 0
    %202 = vmatprep.mubr.bf16.mxu0 0
    %203 = vmatmul.mubr.bf16.gmra.mrb[0].mxu0 %v98
    %v204 = vpop.f32.mrb[0].mxu0
    %v205 = vadd.f32 %v120, %v204
    %v206 = vpop.f32.mrb[0].mxu0
    %v207 = vpop.f32.mrb[0].mxu0
    %v208 = vpop.f32.mrb[0].mxu0
    %209 = vdwg.mxu0
    %v210 = vmax.f32 %v205, 0.0
    %v211 = vpack.c.bf16 %v210, %v210
    %v212 = vld [vmem:[%s5] sm:$0xf]
    %v213 = vld [vmem:[%s5 + $0x4] sm:$0xf]
    %v214 = vld [vmem:[%s5 + $0x8] sm:$0xf]
    %v215 = vld [vmem:[%s5 + $0xc] sm:$0xf]
    %v216 = vld [vmem:[%s5 + $0x10] sm:$0xf]
    %v217 = vld [vmem:[%s5 + $0x14] sm:$0xf]
    %v218 = vld [vmem:[%s5 + $0x18] sm:$0xf]
    %v219 = vld [vmem:[%s5 + $0x1c] sm:$0xf]
    %v220 = vld [vmem:[%s5 + $0x20] sm:$0xf]
    %v221 = vld [vmem:[%s5 + $0x24] sm:$0xf]
    %v222 = vld [vmem:[%s5 + $0x28] sm:$0xf]
    %v223 = vld [vmem:[%s5 + $0x2c] sm:$0xf]
    %v224 = vld [vmem:[%s5 + $0x30] sm:$0xf]
    %v225 = vld [vmem:[%s5 + $0x34] sm:$0xf]
    %v226 = vld [vmem:[%s5 + $0x38] sm:$0xf]
    %v227 = vld [vmem:[%s5 + $0x3c] sm:$0xf]
    %v228 = vld [vmem:[%s6] sm:$0x1]
    %v230 = vlaneseq
    %v231 = vshrl.u32 %v230, 7
    %v232 = vsub.s32 0, %v231
    %v233 = vrot.slane %v228, %v232
    %v251 = vunpack.c.l.b16 %v212
    %v252 = vunpack.c.l.b16 %v213
    %v253 = vunpack.c.l.b16 %v214
    %v254 = vunpack.c.l.b16 %v215
    %v255 = vunpack.c.l.b16 %v216
    %v256 = vunpack.c.l.b16 %v217
    %v257 = vunpack.c.l.b16 %v218
    %v258 = vunpack.c.l.b16 %v219
    %v259 = vunpack.c.l.b16 %v220
    %v260 = vunpack.c.l.b16 %v221
    %v261 = vunpack.c.l.b16 %v222
    %v262 = vunpack.c.l.b16 %v223
    %v263 = vunpack.c.l.b16 %v224
    %v264 = vunpack.c.l.b16 %v225
    %v265 = vunpack.c.l.b16 %v226
    %v266 = vunpack.c.l.b16 %v227
    %v267 = vpack.c.b16 %v252, %v251
    %v268 = vpack.c.b16 %v254, %v253
    %v269 = vpack.c.b16 %v256, %v255
    %v270 = vpack.c.b16 %v258, %v257
    %v271 = vpack.c.b16 %v260, %v259
    %v272 = vpack.c.b16 %v262, %v261
    %v273 = vpack.c.b16 %v264, %v263
    %v274 = vpack.c.b16 %v266, %v265
    %283 = vmatprep.subr.bf16.mxu0 0
    %284 = vmatpush1.bf16.msra.mxu0 %v267
    %285 = vmatprep.subr.bf16.mxu0 0
    %286 = vmatpush1.bf16.msra.mxu0 %v268
    %287 = vmatprep.subr.bf16.mxu0 0
    %288 = vmatpush1.bf16.msra.mxu0 %v269
    %289 = vmatprep.subr.bf16.mxu0 0
    %290 = vmatpush1.bf16.msra.mxu0 %v270
    %291 = vmatprep.subr.bf16.mxu0 0
    %292 = vmatpush1.bf16.msra.mxu0 %v271
    %293 = vmatprep.subr.bf16.mxu0 0
    %294 = vmatpush1.bf16.msra.mxu0 %v272
    %295 = vmatprep.subr.bf16.mxu0 0
    %296 = vmatpush1.bf16.msra.mxu0 %v273
    %297 = vmatprep.subr.bf16.mxu0 0
    %298 = vmatpush1.bf16.msra.mxu0 %v274
    %299 = vmatprep.subr.bf16.mxu0 0
    %300 = vmatpush1.bf16.msra.mxu0 0
    %301 = vmatprep.subr.bf16.mxu0 0
    %302 = vmatpush1.bf16.msra.mxu0 0
    %303 = vmatprep.subr.bf16.mxu0 0
    %304 = vmatpush1.bf16.msra.mxu0 0
    %305 = vmatprep.subr.bf16.mxu0 0
    %306 = vmatpush1.bf16.msra.mxu0 0
    %307 = vmatprep.subr.bf16.mxu0 0
    %308 = vmatpush1.bf16.msra.mxu0 0
    %309 = vmatprep.subr.bf16.mxu0 0
    %310 = vmatpush1.bf16.msra.mxu0 0
    %311 = vmatprep.subr.bf16.mxu0 0
    %312 = vmatpush1.bf16.msra.mxu0 0
    %313 = vmatprep.subr.bf16.mxu0 0
    %314 = vmatpush1.bf16.msra.mxu0 0
    %315 = vmatprep.mubr.bf16.mxu0 0
    %316 = vmatmul.mubr.bf16.gmra.mrb[0].mxu0 %v211
    %v317 = vpop.f32.mrb[0].mxu0
    %v318 = vadd.f32 %v233, %v317
    %v319 = vpop.f32.mrb[0].mxu0
    %v320 = vpop.f32.mrb[0].mxu0
    %v321 = vpop.f32.mrb[0].mxu0
    %322 = vdwg.mxu0
    %323 = vst [vmem:[#allocation2] sm:$0xff] %v318
    // Predicated region
    $region30: #{neural_net_forward.1} parent=1 // pred_check
      _
    $region31: #{neural_net_forward.1} parent=1 // pred_check_branch
      %325 = sbr.rel (0) target = $region33
    $region32: #{neural_net_forward.1} parent=1 // pred_region
      %s327 = ssub.s32 128, 128
      %328 = vsyncadd [#allocation3], %s327
      %s330 = sshll.u32 [#allocation2], 4
      %s331 = int_to_ptr.vmem [resolvable:$true] %s330
      %333 = dma.vmem_to_hbm [thread:$0]  %s331, 128, %s7, [#allocation3]
    $region33: #{neural_net_forward.1} parent=1 // pred_fallthru
      _
    // Predicated region
    $region34: #{neural_net_forward.1} parent=1 // pred_check
      _
    $region35: #{neural_net_forward.1} parent=1 // pred_check_branch
      %335 = sbr.rel (0) target = $region37
    $region36: #{neural_net_forward.1} parent=1 // pred_region
      %336 = dma.done [#allocation3], 128
    $region37: #{neural_net_forward.1} parent=1 // pred_fallthru
      _
    %337 = vsyncpa [#allocation3], 1

</llo_original>
